<compile_context>
chip_gen: v7x
topology: tpu7x:2x2x1
jax: 0.10.0
libtpu: 0.0.40
codegen_flags: <defaults>
</compile_context>

<pallas_src>
import functools

import jax
import jax.numpy as jnp
from jax.experimental import pallas as pl
from jax.experimental.pallas import tpu as pltpu

LANE = 128
SUBLANE = 8
_RESIDENT_W_BYTES = 8 * 1024 * 1024  # keep W fully VMEM-resident if it fits this


def _round_up(x, m):
    return ((x + m - 1) // m) * m


def _ts_resident_kernel(t_ref, x_ref, w_ref, b_ref, o_ref):
    # t_ref : SMEM (1, 1)  scalar temperature
    # x_ref : VMEM (tm, Fp) activation tile (bf16 stream)
    # w_ref : VMEM (Fp, Kp) fully resident weight
    # b_ref : VMEM (1, Kp)  f32 bias (lane-padded)
    # o_ref : VMEM (tm, Kp) f32 temperature-scaled logits tile
    acc = jnp.dot(x_ref[...], w_ref[...], preferred_element_type=jnp.float32)
    o_ref[...] = ((acc + b_ref[...]) / t_ref[0, 0]).astype(o_ref.dtype)


def _ts_reduction_kernel(t_ref, x_ref, w_ref, b_ref, o_ref):
    # Fallback for very large F: the f32 output block is resident across the
    # k (reduction) axis and doubles as the accumulator; bias folded into init.
    k = pl.program_id(1)

    @pl.when(k == 0)
    def _():
        o_ref[...] = jnp.broadcast_to(b_ref[...], o_ref.shape)

    o_ref[...] += jnp.dot(x_ref[...], w_ref[...], preferred_element_type=jnp.float32)

    @pl.when(k == pl.num_programs(1) - 1)
    def _():
        o_ref[...] = o_ref[...] / t_ref[0, 0]


@functools.partial(
    jax.jit, static_argnames=("tm_max", "tf", "compute_dtype", "force_reduction")
)
def temperature_scaling_forward(
    x_nchw, weight, bias, temperature, *,
    tm_max=512, tf=2048, compute_dtype=jnp.bfloat16, force_reduction=False,
):
    """out = (flatten(x) @ weight + bias) / T, matching TemperatureScaling.forward."""
    N = x_nchw.shape[0]
    x_flat = x_nchw.reshape(N, -1)   # NCHW -> (N, F), same element order as torch .view
    F = x_flat.shape[1]
    K = weight.shape[1]

    Kp = _round_up(K, LANE)          # lane-dense output width (unmasked stores)

    # --- batch tiling: adaptive tm so pad waste is <= one sublane per tile ---
    n_tiles = -(-N // tm_max)
    if n_tiles < 2 and N >= 2 * SUBLANE:
        n_tiles = 2                  # let v7x's two TensorCores both get a tile
    tm = _round_up(-(-N // n_tiles), SUBLANE)
    Np = n_tiles * tm

    # --- feature tiling: resident W if it fits, else k-reduction fallback ---
    itemsize = jnp.dtype(compute_dtype).itemsize
    Fp_lane = _round_up(F, LANE)
    resident_w = (not force_reduction) and (Fp_lane * Kp * itemsize <= _RESIDENT_W_BYTES)
    if resident_w:
        Fp = Fp_lane
        tf_eff = Fp
    else:
        tf_eff = min(_round_up(tf, LANE), Fp_lane)
        Fp = _round_up(F, tf_eff)

    # Narrow compute dtype for the HBM streams; pad only the remainder rows/cols
    # (padded x rows/cols and padded W rows are zero -> contribute nothing).
    x_c = x_flat.astype(compute_dtype)
    if Np != N or Fp != F:
        x_c = jnp.pad(x_c, ((0, Np - N), (0, Fp - F)))
    w_p = jnp.zeros((Fp, Kp), compute_dtype).at[:F, :K].set(weight.astype(compute_dtype))
    b_p = jnp.zeros((1, Kp), jnp.float32).at[:, :K].set(
        bias.reshape(1, K).astype(jnp.float32)
    )
    t2d = jnp.reshape(temperature, (1, 1)).astype(jnp.float32)

    if resident_w:
        grid = (n_tiles,)
        kernel = _ts_resident_kernel
        in_specs = [
            pl.BlockSpec(memory_space=pltpu.SMEM),              # temperature scalar
            pl.BlockSpec((tm, Fp), lambda i: (i, 0)),           # x batch tile
            pl.BlockSpec((Fp, Kp), lambda i: (0, 0)),           # VMEM-resident W
            pl.BlockSpec((1, Kp), lambda i: (0, 0)),            # bias (resident)
        ]
        out_spec = pl.BlockSpec((tm, Kp), lambda i: (i, 0))     # lane-dense output
        dim_sem = ("parallel",)
    else:
        grid = (n_tiles, Fp // tf_eff)                          # reduction axis last
        kernel = _ts_reduction_kernel
        in_specs = [
            pl.BlockSpec(memory_space=pltpu.SMEM),
            pl.BlockSpec((tm, tf_eff), lambda i, k: (i, k)),
            pl.BlockSpec((tf_eff, Kp), lambda i, k: (k, 0)),
            pl.BlockSpec((1, Kp), lambda i, k: (0, 0)),
        ]
        out_spec = pl.BlockSpec((tm, Kp), lambda i, k: (i, 0))
        dim_sem = ("parallel", "arbitrary")

    out_padded = pl.pallas_call(
        kernel,
        out_shape=jax.ShapeDtypeStruct((Np, Kp), jnp.float32),
        grid=grid,
        in_specs=in_specs,
        out_specs=out_spec,
        compiler_params=pltpu.CompilerParams(
            dimension_semantics=dim_sem,
            vmem_limit_bytes=48 * 1024 * 1024,   # v7x-safe; tiles stay well under
        ),
    )(t2d, x_c, w_p, b_p)

    return out_padded[:N, :K]


if __name__ == "__main__":
    key = jax.random.PRNGKey(0)
    k_x, k_w, k_b = jax.random.split(key, 3)

    # Small shapes consistent with the module: NCHW image batch, 10-way classifier.
    N, C, H, W = 2, 4, 16, 16
    num_classes = 10
    feat = C * H * W

    x = jax.random.normal(k_x, (N, C, H, W), dtype=jnp.float32)
    weight = jax.random.normal(k_w, (feat, num_classes), dtype=jnp.float32) * 0.02
    bias = jax.random.normal(k_b, (num_classes,), dtype=jnp.float32) * 0.1
    # TODO(synk): set_temperature (Adam + CrossEntropy fitting of T on a
    # validation loader) is training logic, not part of the forward hot path,
    # so it is not ported; T is supplied as a fixed scalar here.
    temperature = jnp.array([1.5], dtype=jnp.float32)

    ref = (x.reshape(N, -1) @ weight + bias) / temperature[0]

    # Resident-W fast path (default).
    out = temperature_scaling_forward(x, weight, bias, temperature)
    jax.block_until_ready(out)
    assert out.shape == ref.shape, "shape mismatch vs reference"
    # bf16 operand stream (f32 accumulation) -> loosen tolerance vs the f32 ref.
    assert jnp.allclose(out, ref, atol=2e-2, rtol=2e-2), "resident path mismatch"

    # Large-F reduction fallback, forced with a small F tile to exercise >1 k step.
    out_red = temperature_scaling_forward(
        x, weight, bias, temperature, tf=256, force_reduction=True
    )
    jax.block_until_ready(out_red)
    assert jnp.allclose(out_red, ref, atol=2e-2, rtol=2e-2), "reduction path mismatch"

    print("KERNEL_OK")
</pallas_src>

<mosaic_0001>
module attributes {stable_mosaic.version = 11 : i64} {
  func.func @_ts_resident_kernel(%arg0: i32, %arg1: memref<1x1xf32, #tpu.memory_space<smem>>, %arg2: memref<8x1024xbf16, #tpu.memory_space<vmem>>, %arg3: memref<1024x128xbf16, #tpu.memory_space<vmem>>, %arg4: memref<1x128xf32, #tpu.memory_space<vmem>>, %arg5: memref<8x128xf32, #tpu.memory_space<vmem>>) attributes {dimension_semantics = [#tpu.dimension_semantics<parallel>], iteration_bounds = array<i64: 1>, scalar_prefetch = 0 : i64, scratch_operands = 0 : i64, tpu.core_type = #tpu.core_type<tc>, window_params = [{transform_indices = @transform_0, window_bounds = array<i64: 1, 1>}, {transform_indices = @transform_1, window_bounds = array<i64: 8, 1024>}, {pipeline_mode = #tpu.pipeline_mode<synchronous>, transform_indices = @transform_2, window_bounds = array<i64: 1024, 128>}, {pipeline_mode = #tpu.pipeline_mode<synchronous>, transform_indices = @transform_3, window_bounds = array<i64: 1, 128>}, {transform_indices = @transform_4, window_bounds = array<i64: 8, 128>}]} {
    %c0 = arith.constant 0 : index
    %c0_0 = arith.constant 0 : index
    %0 = vector.load %arg2[%c0, %c0_0] : memref<8x1024xbf16, #tpu.memory_space<vmem>>, vector<8x1024xbf16>
    %c0_1 = arith.constant 0 : index
    %c0_2 = arith.constant 0 : index
    %1 = vector.load %arg3[%c0_1, %c0_2] : memref<1024x128xbf16, #tpu.memory_space<vmem>>, vector<1024x128xbf16>
    %cst = arith.constant dense<0.000000e+00> : vector<8x128xf32>
    %2 = tpu.matmul %0, %1, %cst {dimension_numbers = #tpu.dot_dimension_numbers<[1], [0], [0], [1], [0, 0, 1, 1], [], []>} : vector<8x1024xbf16>, vector<1024x128xbf16>, vector<8x128xf32> -> vector<8x128xf32>
    %c0_3 = arith.constant 0 : index
    %c0_4 = arith.constant 0 : index
    %3 = vector.load %arg4[%c0_3, %c0_4] : memref<1x128xf32, #tpu.memory_space<vmem>>, vector<1x128xf32>
    %4 = vector.broadcast %3 : vector<1x128xf32> to vector<8x128xf32>
    %5 = arith.addf %2, %4 : vector<8x128xf32>
    %c0_5 = arith.constant 0 : index
    %c0_6 = arith.constant 0 : index
    %6 = memref.load %arg1[%c0_5, %c0_6] : memref<1x1xf32, #tpu.memory_space<smem>>
    %7 = vector.broadcast %6 : f32 to vector<8x128xf32>
    %8 = arith.divf %5, %7 : vector<8x128xf32>
    %c0_7 = arith.constant 0 : index
    %c0_8 = arith.constant 0 : index
    %9 = vector.load %arg5[%c0_7, %c0_8] : memref<8x128xf32, #tpu.memory_space<vmem>>, vector<8x128xf32>
    tpu.vector_store %arg5[%c0_7, %c0_8], %8 {strides = array<i32>} : memref<8x128xf32, #tpu.memory_space<vmem>>, vector<8x128xf32>,
    return
  }
  func.func @transform_0(%arg0: i32) -> (i32, i32) {
    %c0_i32 = arith.constant 0 : i32
    %c0_i32_0 = arith.constant 0 : i32
    %c0_i32_1 = arith.constant 0 : i32
    return %c0_i32, %c0_i32_0 : i32, i32
  }
  func.func @transform_1(%arg0: i32) -> (i32, i32) {
    %c0_i32 = arith.constant 0 : i32
    %c0_i32_0 = arith.constant 0 : i32
    return %arg0, %c0_i32 : i32, i32
  }
  func.func @transform_2(%arg0: i32) -> (i32, i32) {
    %c0_i32 = arith.constant 0 : i32
    %c0_i32_0 = arith.constant 0 : i32
    %c0_i32_1 = arith.constant 0 : i32
    return %c0_i32, %c0_i32_0 : i32, i32
  }
  func.func @transform_3(%arg0: i32) -> (i32, i32) {
    %c0_i32 = arith.constant 0 : i32
    %c0_i32_0 = arith.constant 0 : i32
    %c0_i32_1 = arith.constant 0 : i32
    return %c0_i32, %c0_i32_0 : i32, i32
  }
  func.func @transform_4(%arg0: i32) -> (i32, i32) {
    %c0_i32 = arith.constant 0 : i32
    %c0_i32_0 = arith.constant 0 : i32
    return %arg0, %c0_i32 : i32, i32
  }
}

</mosaic_0001>

<llo_original>
// kernel: temperature_scaling_forward.1
$region0: #{temperature_scaling_forward.1}
  #allocation0 [shape = 'u32[]', space=smem, size = 0x4, offset = 0x4, fixed_abs, tag = 'smem constant byte address 0x4 - core index']
  #allocation1 [shape = 'u32[144,128]{1,0:T(1,128)}', space=vmem, size = 0x12000, scoped, tag = 'internal scratch']
  #allocation2 [shape = 'f32[1,1]{1,0:T(1,128)S(6)}', space=smem, size = 0x200, scoped, tag = 'scoped memory for temperature_scaling_forward.1']
  %s0 = inlined_call_operand.<no memory space> [shape: f32[1,1], index: 0, kind: input, shape index: {}]
  %s1 = inlined_call_operand.vmem [shape: bf16[8,1024], index: 1, kind: input, shape index: {}]
  %s2 = inlined_call_operand.vmem [shape: bf16[1024,128], index: 2, kind: input, shape index: {}]
  %s3 = inlined_call_operand.vmem [shape: f32[1,128], index: 3, kind: input, shape index: {}]
  %s4 = inlined_call_operand.vmem [shape: f32[8,128], index: 4, kind: output, shape index: {}]
  %s5 = sld [smem:[#allocation0]]
  $region26: #{temperature_scaling_forward.1} parent=0
    _
  %s7 = ssub.s32 1, %s5
  %s8 = scalar_select 0, %s7, %s5
  %9 = sst [smem:[#allocation2]] %s0
  // Predicated region
  $region2: #{temperature_scaling_forward.1} parent=0 // pred_check
    _
  $region3: #{temperature_scaling_forward.1} parent=0 // pred_check_branch
    %11 = sbr.rel (0) target = $region5
  $region4: #{temperature_scaling_forward.1} parent=0 // pred_region
    _
  $region5: #{temperature_scaling_forward.1} parent=0 // pred_fallthru
    _
  // Predicated region
  $region6: #{temperature_scaling_forward.1} parent=0 // pred_check
    _
  $region7: #{temperature_scaling_forward.1} parent=0 // pred_check_branch
    %13 = sbr.rel (0) target = $region9
  $region8: #{temperature_scaling_forward.1} parent=0 // pred_region
    _
  $region9: #{temperature_scaling_forward.1} parent=0 // pred_fallthru
    _
  // Predicated region
  $region10: #{temperature_scaling_forward.1} parent=0 // pred_check
    _
  $region11: #{temperature_scaling_forward.1} parent=0 // pred_check_branch
    %15 = sbr.rel (0) target = $region13
  $region12: #{temperature_scaling_forward.1} parent=0 // pred_region
    _
  $region13: #{temperature_scaling_forward.1} parent=0 // pred_fallthru
    _
  // Predicated region
  $region14: #{temperature_scaling_forward.1} parent=0 // pred_check
    _
  $region15: #{temperature_scaling_forward.1} parent=0 // pred_check_branch
    %17 = sbr.rel (0) target = $region17
  $region16: #{temperature_scaling_forward.1} parent=0 // pred_region
    _
  $region17: #{temperature_scaling_forward.1} parent=0 // pred_fallthru
    _
  %v19 = vld [vmem:[%s1] sm:$0xff]
  %v20 = vld [vmem:[%s1 + $0x8] sm:$0xff]
  %v21 = vld [vmem:[%s1 + $0x10] sm:$0xff]
  %v22 = vld [vmem:[%s1 + $0x18] sm:$0xff]
  %v23 = vld [vmem:[%s2] sm:$0xf]
  %v24 = vld [vmem:[%s2 + $0x4] sm:$0xf]
  %v25 = vld [vmem:[%s2 + $0x8] sm:$0xf]
  %v26 = vld [vmem:[%s2 + $0xc] sm:$0xf]
  %v27 = vld [vmem:[%s2 + $0x10] sm:$0xf]
  %v28 = vld [vmem:[%s2 + $0x14] sm:$0xf]
  %v29 = vld [vmem:[%s2 + $0x18] sm:$0xf]
  %v30 = vld [vmem:[%s2 + $0x1c] sm:$0xf]
  %v31 = vld [vmem:[%s2 + $0x20] sm:$0xf]
  %v32 = vld [vmem:[%s2 + $0x24] sm:$0xf]
  %v33 = vld [vmem:[%s2 + $0x28] sm:$0xf]
  %v34 = vld [vmem:[%s2 + $0x2c] sm:$0xf]
  %v35 = vld [vmem:[%s2 + $0x30] sm:$0xf]
  %v36 = vld [vmem:[%s2 + $0x34] sm:$0xf]
  %v37 = vld [vmem:[%s2 + $0x38] sm:$0xf]
  %v38 = vld [vmem:[%s2 + $0x3c] sm:$0xf]
  %v39 = vld [vmem:[%s2 + $0x40] sm:$0xf]
  %v40 = vld [vmem:[%s2 + $0x44] sm:$0xf]
  %v41 = vld [vmem:[%s2 + $0x48] sm:$0xf]
  %v42 = vld [vmem:[%s2 + $0x4c] sm:$0xf]
  %v43 = vld [vmem:[%s2 + $0x50] sm:$0xf]
  %v44 = vld [vmem:[%s2 + $0x54] sm:$0xf]
  %v45 = vld [vmem:[%s2 + $0x58] sm:$0xf]
  %v46 = vld [vmem:[%s2 + $0x5c] sm:$0xf]
  %v47 = vld [vmem:[%s2 + $0x60] sm:$0xf]
  %v48 = vld [vmem:[%s2 + $0x64] sm:$0xf]
  %v49 = vld [vmem:[%s2 + $0x68] sm:$0xf]
  %v50 = vld [vmem:[%s2 + $0x6c] sm:$0xf]
  %v51 = vld [vmem:[%s2 + $0x70] sm:$0xf]
  %v52 = vld [vmem:[%s2 + $0x74] sm:$0xf]
  %v53 = vld [vmem:[%s2 + $0x78] sm:$0xf]
  %v54 = vld [vmem:[%s2 + $0x7c] sm:$0xf]
  %v55 = vld [vmem:[%s2 + $0x80] sm:$0xf]
  %v56 = vld [vmem:[%s2 + $0x84] sm:$0xf]
  %v57 = vld [vmem:[%s2 + $0x88] sm:$0xf]
  %v58 = vld [vmem:[%s2 + $0x8c] sm:$0xf]
  %v59 = vld [vmem:[%s2 + $0x90] sm:$0xf]
  %v60 = vld [vmem:[%s2 + $0x94] sm:$0xf]
  %v61 = vld [vmem:[%s2 + $0x98] sm:$0xf]
  %v62 = vld [vmem:[%s2 + $0x9c] sm:$0xf]
  %v63 = vld [vmem:[%s2 + $0xa0] sm:$0xf]
  %v64 = vld [vmem:[%s2 + $0xa4] sm:$0xf]
  %v65 = vld [vmem:[%s2 + $0xa8] sm:$0xf]
  %v66 = vld [vmem:[%s2 + $0xac] sm:$0xf]
  %v67 = vld [vmem:[%s2 + $0xb0] sm:$0xf]
  %v68 = vld [vmem:[%s2 + $0xb4] sm:$0xf]
  %v69 = vld [vmem:[%s2 + $0xb8] sm:$0xf]
  %v70 = vld [vmem:[%s2 + $0xbc] sm:$0xf]
  %v71 = vld [vmem:[%s2 + $0xc0] sm:$0xf]
  %v72 = vld [vmem:[%s2 + $0xc4] sm:$0xf]
  %v73 = vld [vmem:[%s2 + $0xc8] sm:$0xf]
  %v74 = vld [vmem:[%s2 + $0xcc] sm:$0xf]
  %v75 = vld [vmem:[%s2 + $0xd0] sm:$0xf]
  %v76 = vld [vmem:[%s2 + $0xd4] sm:$0xf]
  %v77 = vld [vmem:[%s2 + $0xd8] sm:$0xf]
  %v78 = vld [vmem:[%s2 + $0xdc] sm:$0xf]
  %v79 = vld [vmem:[%s2 + $0xe0] sm:$0xf]
  %v80 = vld [vmem:[%s2 + $0xe4] sm:$0xf]
  %v81 = vld [vmem:[%s2 + $0xe8] sm:$0xf]
  %v82 = vld [vmem:[%s2 + $0xec] sm:$0xf]
  %v83 = vld [vmem:[%s2 + $0xf0] sm:$0xf]
  %v84 = vld [vmem:[%s2 + $0xf4] sm:$0xf]
  %v85 = vld [vmem:[%s2 + $0xf8] sm:$0xf]
  %v86 = vld [vmem:[%s2 + $0xfc] sm:$0xf]
  %v87 = vld [vmem:[%s2 + $0x100] sm:$0xf]
  %v88 = vld [vmem:[%s2 + $0x104] sm:$0xf]
  %v89 = vld [vmem:[%s2 + $0x108] sm:$0xf]
  %v90 = vld [vmem:[%s2 + $0x10c] sm:$0xf]
  %v91 = vld [vmem:[%s2 + $0x110] sm:$0xf]
  %v92 = vld [vmem:[%s2 + $0x114] sm:$0xf]
  %v93 = vld [vmem:[%s2 + $0x118] sm:$0xf]
  %v94 = vld [vmem:[%s2 + $0x11c] sm:$0xf]
  %v95 = vld [vmem:[%s2 + $0x120] sm:$0xf]
  %v96 = vld [vmem:[%s2 + $0x124] sm:$0xf]
  %v97 = vld [vmem:[%s2 + $0x128] sm:$0xf]
  %v98 = vld [vmem:[%s2 + $0x12c] sm:$0xf]
  %v99 = vld [vmem:[%s2 + $0x130] sm:$0xf]
  %v100 = vld [vmem:[%s2 + $0x134] sm:$0xf]
  %v101 = vld [vmem:[%s2 + $0x138] sm:$0xf]
  %v102 = vld [vmem:[%s2 + $0x13c] sm:$0xf]
  %v103 = vld [vmem:[%s2 + $0x140] sm:$0xf]
  %v104 = vld [vmem:[%s2 + $0x144] sm:$0xf]
  %v105 = vld [vmem:[%s2 + $0x148] sm:$0xf]
  %v106 = vld [vmem:[%s2 + $0x14c] sm:$0xf]
  %v107 = vld [vmem:[%s2 + $0x150] sm:$0xf]
  %v108 = vld [vmem:[%s2 + $0x154] sm:$0xf]
  %v109 = vld [vmem:[%s2 + $0x158] sm:$0xf]
  %v110 = vld [vmem:[%s2 + $0x15c] sm:$0xf]
  %v111 = vld [vmem:[%s2 + $0x160] sm:$0xf]
  %v112 = vld [vmem:[%s2 + $0x164] sm:$0xf]
  %v113 = vld [vmem:[%s2 + $0x168] sm:$0xf]
  %v114 = vld [vmem:[%s2 + $0x16c] sm:$0xf]
  %v115 = vld [vmem:[%s2 + $0x170] sm:$0xf]
  %v116 = vld [vmem:[%s2 + $0x174] sm:$0xf]
  %v117 = vld [vmem:[%s2 + $0x178] sm:$0xf]
  %v118 = vld [vmem:[%s2 + $0x17c] sm:$0xf]
  %v119 = vld [vmem:[%s2 + $0x180] sm:$0xf]
  %v120 = vld [vmem:[%s2 + $0x184] sm:$0xf]
  %v121 = vld [vmem:[%s2 + $0x188] sm:$0xf]
  %v122 = vld [vmem:[%s2 + $0x18c] sm:$0xf]
  %v123 = vld [vmem:[%s2 + $0x190] sm:$0xf]
  %v124 = vld [vmem:[%s2 + $0x194] sm:$0xf]
  %v125 = vld [vmem:[%s2 + $0x198] sm:$0xf]
  %v126 = vld [vmem:[%s2 + $0x19c] sm:$0xf]
  %v127 = vld [vmem:[%s2 + $0x1a0] sm:$0xf]
  %v128 = vld [vmem:[%s2 + $0x1a4] sm:$0xf]
  %v129 = vld [vmem:[%s2 + $0x1a8] sm:$0xf]
  %v130 = vld [vmem:[%s2 + $0x1ac] sm:$0xf]
  %v131 = vld [vmem:[%s2 + $0x1b0] sm:$0xf]
  %v132 = vld [vmem:[%s2 + $0x1b4] sm:$0xf]
  %v133 = vld [vmem:[%s2 + $0x1b8] sm:$0xf]
  %v134 = vld [vmem:[%s2 + $0x1bc] sm:$0xf]
  %v135 = vld [vmem:[%s2 + $0x1c0] sm:$0xf]
  %v136 = vld [vmem:[%s2 + $0x1c4] sm:$0xf]
  %v137 = vld [vmem:[%s2 + $0x1c8] sm:$0xf]
  %v138 = vld [vmem:[%s2 + $0x1cc] sm:$0xf]
  %v139 = vld [vmem:[%s2 + $0x1d0] sm:$0xf]
  %v140 = vld [vmem:[%s2 + $0x1d4] sm:$0xf]
  %v141 = vld [vmem:[%s2 + $0x1d8] sm:$0xf]
  %v142 = vld [vmem:[%s2 + $0x1dc] sm:$0xf]
  %v143 = vld [vmem:[%s2 + $0x1e0] sm:$0xf]
  %v144 = vld [vmem:[%s2 + $0x1e4] sm:$0xf]
  %v145 = vld [vmem:[%s2 + $0x1e8] sm:$0xf]
  %v146 = vld [vmem:[%s2 + $0x1ec] sm:$0xf]
  %v147 = vld [vmem:[%s2 + $0x1f0] sm:$0xf]
  %v148 = vld [vmem:[%s2 + $0x1f4] sm:$0xf]
  %v149 = vld [vmem:[%s2 + $0x1f8] sm:$0xf]
  %v150 = vld [vmem:[%s2 + $0x1fc] sm:$0xf]
  %v151 = vld [vmem:[%s3] sm:$0x1]
  %v153 = vlaneseq
  %v154 = vshrl.u32 %v153, 7
  %v155 = vsub.s32 0, %v154
  %v156 = vrot.slane %v151, %v155
  %v162 = vunpack.c.l.b16 %v19
  %v163 = vunpack.c.h.b16 %v19
  %v164 = vunpack.c.l.b16 %v20
  %v165 = vunpack.c.h.b16 %v20
  %v166 = vunpack.c.l.b16 %v21
  %v167 = vunpack.c.h.b16 %v21
  %v168 = vunpack.c.l.b16 %v22
  %v169 = vunpack.c.h.b16 %v22
  %v170 = vpack.c.b16 %v162, %v162
  %v171 = vpack.c.b16 %v163, %v163
  %v172 = vpack.c.b16 %v164, %v164
  %v173 = vpack.c.b16 %v165, %v165
  %v174 = vpack.c.b16 %v166, %v166
  %v175 = vpack.c.b16 %v167, %v167
  %v176 = vpack.c.b16 %v168, %v168
  %v177 = vpack.c.b16 %v169, %v169
  %v314 = vunpack.c.l.b16 %v23
  %v315 = vunpack.c.l.b16 %v24
  %v316 = vunpack.c.l.b16 %v25
  %v317 = vunpack.c.l.b16 %v26
  %v318 = vunpack.c.l.b16 %v27
  %v319 = vunpack.c.l.b16 %v28
  %v320 = vunpack.c.l.b16 %v29
  %v321 = vunpack.c.l.b16 %v30
  %v322 = vunpack.c.l.b16 %v31
  %v323 = vunpack.c.l.b16 %v32
  %v324 = vunpack.c.l.b16 %v33
  %v325 = vunpack.c.l.b16 %v34
  %v326 = vunpack.c.l.b16 %v35
  %v327 = vunpack.c.l.b16 %v36
  %v328 = vunpack.c.l.b16 %v37
  %v329 = vunpack.c.l.b16 %v38
  %v330 = vunpack.c.l.b16 %v39
  %v331 = vunpack.c.l.b16 %v40
  %v332 = vunpack.c.l.b16 %v41
  %v333 = vunpack.c.l.b16 %v42
  %v334 = vunpack.c.l.b16 %v43
  %v335 = vunpack.c.l.b16 %v44
  %v336 = vunpack.c.l.b16 %v45
  %v337 = vunpack.c.l.b16 %v46
  %v338 = vunpack.c.l.b16 %v47
  %v339 = vunpack.c.l.b16 %v48
  %v340 = vunpack.c.l.b16 %v49
  %v341 = vunpack.c.l.b16 %v50
  %v342 = vunpack.c.l.b16 %v51
  %v343 = vunpack.c.l.b16 %v52
  %v344 = vunpack.c.l.b16 %v53
  %v345 = vunpack.c.l.b16 %v54
  %v346 = vunpack.c.l.b16 %v55
  %v347 = vunpack.c.l.b16 %v56
  %v348 = vunpack.c.l.b16 %v57
  %v349 = vunpack.c.l.b16 %v58
  %v350 = vunpack.c.l.b16 %v59
  %v351 = vunpack.c.l.b16 %v60
  %v352 = vunpack.c.l.b16 %v61
  %v353 = vunpack.c.l.b16 %v62
  %v354 = vunpack.c.l.b16 %v63
  %v355 = vunpack.c.l.b16 %v64
  %v356 = vunpack.c.l.b16 %v65
  %v357 = vunpack.c.l.b16 %v66
  %v358 = vunpack.c.l.b16 %v67
  %v359 = vunpack.c.l.b16 %v68
  %v360 = vunpack.c.l.b16 %v69
  %v361 = vunpack.c.l.b16 %v70
  %v362 = vunpack.c.l.b16 %v71
  %v363 = vunpack.c.l.b16 %v72
  %v364 = vunpack.c.l.b16 %v73
  %v365 = vunpack.c.l.b16 %v74
  %v366 = vunpack.c.l.b16 %v75
  %v367 = vunpack.c.l.b16 %v76
  %v368 = vunpack.c.l.b16 %v77
  %v369 = vunpack.c.l.b16 %v78
  %v370 = vunpack.c.l.b16 %v79
  %v371 = vunpack.c.l.b16 %v80
  %v372 = vunpack.c.l.b16 %v81
  %v373 = vunpack.c.l.b16 %v82
  %v374 = vunpack.c.l.b16 %v83
  %v375 = vunpack.c.l.b16 %v84
  %v376 = vunpack.c.l.b16 %v85
  %v377 = vunpack.c.l.b16 %v86
  %v378 = vunpack.c.l.b16 %v87
  %v379 = vunpack.c.l.b16 %v88
  %v380 = vunpack.c.l.b16 %v89
  %v381 = vunpack.c.l.b16 %v90
  %v382 = vunpack.c.l.b16 %v91
  %v383 = vunpack.c.l.b16 %v92
  %v384 = vunpack.c.l.b16 %v93
  %v385 = vunpack.c.l.b16 %v94
  %v386 = vunpack.c.l.b16 %v95
  %v387 = vunpack.c.l.b16 %v96
  %v388 = vunpack.c.l.b16 %v97
  %v389 = vunpack.c.l.b16 %v98
  %v390 = vunpack.c.l.b16 %v99
  %v391 = vunpack.c.l.b16 %v100
  %v392 = vunpack.c.l.b16 %v101
  %v393 = vunpack.c.l.b16 %v102
  %v394 = vunpack.c.l.b16 %v103
  %v395 = vunpack.c.l.b16 %v104
  %v396 = vunpack.c.l.b16 %v105
  %v397 = vunpack.c.l.b16 %v106
  %v398 = vunpack.c.l.b16 %v107
  %v399 = vunpack.c.l.b16 %v108
  %v400 = vunpack.c.l.b16 %v109
  %v401 = vunpack.c.l.b16 %v110
  %v402 = vunpack.c.l.b16 %v111
  %v403 = vunpack.c.l.b16 %v112
  %v404 = vunpack.c.l.b16 %v113
  %v405 = vunpack.c.l.b16 %v114
  %v406 = vunpack.c.l.b16 %v115
  %v407 = vunpack.c.l.b16 %v116
  %v408 = vunpack.c.l.b16 %v117
  %v409 = vunpack.c.l.b16 %v118
  %v410 = vunpack.c.l.b16 %v119
  %v411 = vunpack.c.l.b16 %v120
  %v412 = vunpack.c.l.b16 %v121
  %v413 = vunpack.c.l.b16 %v122
  %v414 = vunpack.c.l.b16 %v123
  %v415 = vunpack.c.l.b16 %v124
  %v416 = vunpack.c.l.b16 %v125
  %v417 = vunpack.c.l.b16 %v126
  %v418 = vunpack.c.l.b16 %v127
  %v419 = vunpack.c.l.b16 %v128
  %v420 = vunpack.c.l.b16 %v129
  %v421 = vunpack.c.l.b16 %v130
  %v422 = vunpack.c.l.b16 %v131
  %v423 = vunpack.c.l.b16 %v132
  %v424 = vunpack.c.l.b16 %v133
  %v425 = vunpack.c.l.b16 %v134
  %v426 = vunpack.c.l.b16 %v135
  %v427 = vunpack.c.l.b16 %v136
  %v428 = vunpack.c.l.b16 %v137
  %v429 = vunpack.c.l.b16 %v138
  %v430 = vunpack.c.l.b16 %v139
  %v431 = vunpack.c.l.b16 %v140
  %v432 = vunpack.c.l.b16 %v141
  %v433 = vunpack.c.l.b16 %v142
  %v434 = vunpack.c.l.b16 %v143
  %v435 = vunpack.c.l.b16 %v144
  %v436 = vunpack.c.l.b16 %v145
  %v437 = vunpack.c.l.b16 %v146
  %v438 = vunpack.c.l.b16 %v147
  %v439 = vunpack.c.l.b16 %v148
  %v440 = vunpack.c.l.b16 %v149
  %v441 = vunpack.c.l.b16 %v150
  %v442 = vpack.c.b16 %v315, %v314
  %v443 = vpack.c.b16 %v317, %v316
  %v444 = vpack.c.b16 %v319, %v318
  %v445 = vpack.c.b16 %v321, %v320
  %v446 = vpack.c.b16 %v323, %v322
  %v447 = vpack.c.b16 %v325, %v324
  %v448 = vpack.c.b16 %v327, %v326
  %v449 = vpack.c.b16 %v329, %v328
  %v450 = vpack.c.b16 %v331, %v330
  %v451 = vpack.c.b16 %v333, %v332
  %v452 = vpack.c.b16 %v335, %v334
  %v453 = vpack.c.b16 %v337, %v336
  %v454 = vpack.c.b16 %v339, %v338
  %v455 = vpack.c.b16 %v341, %v340
  %v456 = vpack.c.b16 %v343, %v342
  %v457 = vpack.c.b16 %v345, %v344
  %v458 = vpack.c.b16 %v347, %v346
  %v459 = vpack.c.b16 %v349, %v348
  %v460 = vpack.c.b16 %v351, %v350
  %v461 = vpack.c.b16 %v353, %v352
  %v462 = vpack.c.b16 %v355, %v354
  %v463 = vpack.c.b16 %v357, %v356
  %v464 = vpack.c.b16 %v359, %v358
  %v465 = vpack.c.b16 %v361, %v360
  %v466 = vpack.c.b16 %v363, %v362
  %v467 = vpack.c.b16 %v365, %v364
  %v468 = vpack.c.b16 %v367, %v366
  %v469 = vpack.c.b16 %v369, %v368
  %v470 = vpack.c.b16 %v371, %v370
  %v471 = vpack.c.b16 %v373, %v372
  %v472 = vpack.c.b16 %v375, %v374
  %v473 = vpack.c.b16 %v377, %v376
  %v474 = vpack.c.b16 %v379, %v378
  %v475 = vpack.c.b16 %v381, %v380
  %v476 = vpack.c.b16 %v383, %v382
  %v477 = vpack.c.b16 %v385, %v384
  %v478 = vpack.c.b16 %v387, %v386
  %v479 = vpack.c.b16 %v389, %v388
  %v480 = vpack.c.b16 %v391, %v390
  %v481 = vpack.c.b16 %v393, %v392
  %v482 = vpack.c.b16 %v395, %v394
  %v483 = vpack.c.b16 %v397, %v396
  %v484 = vpack.c.b16 %v399, %v398
  %v485 = vpack.c.b16 %v401, %v400
  %v486 = vpack.c.b16 %v403, %v402
  %v487 = vpack.c.b16 %v405, %v404
  %v488 = vpack.c.b16 %v407, %v406
  %v489 = vpack.c.b16 %v409, %v408
  %v490 = vpack.c.b16 %v411, %v410
  %v491 = vpack.c.b16 %v413, %v412
  %v492 = vpack.c.b16 %v415, %v414
  %v493 = vpack.c.b16 %v417, %v416
  %v494 = vpack.c.b16 %v419, %v418
  %v495 = vpack.c.b16 %v421, %v420
  %v496 = vpack.c.b16 %v423, %v422
  %v497 = vpack.c.b16 %v425, %v424
  %v498 = vpack.c.b16 %v427, %v426
  %v499 = vpack.c.b16 %v429, %v428
  %v500 = vpack.c.b16 %v431, %v430
  %v501 = vpack.c.b16 %v433, %v432
  %v502 = vpack.c.b16 %v435, %v434
  %v503 = vpack.c.b16 %v437, %v436
  %v504 = vpack.c.b16 %v439, %v438
  %v505 = vpack.c.b16 %v441, %v440
  %570 = vmatprep.subr.bf16.mxu0 0
  %571 = vmatpush1.bf16.msra.mxu0 %v442
  %572 = vmatprep.subr.bf16.mxu0 0
  %573 = vmatpush1.bf16.msra.mxu0 %v443
  %574 = vmatprep.subr.bf16.mxu0 0
  %575 = vmatpush1.bf16.msra.mxu0 %v444
  %576 = vmatprep.subr.bf16.mxu0 0
  %577 = vmatpush1.bf16.msra.mxu0 %v445
  %578 = vmatprep.subr.bf16.mxu0 0
  %579 = vmatpush1.bf16.msra.mxu0 %v446
  %580 = vmatprep.subr.bf16.mxu0 0
  %581 = vmatpush1.bf16.msra.mxu0 %v447
  %582 = vmatprep.subr.bf16.mxu0 0
  %583 = vmatpush1.bf16.msra.mxu0 %v448
  %584 = vmatprep.subr.bf16.mxu0 0
  %585 = vmatpush1.bf16.msra.mxu0 %v449
  %586 = vmatprep.subr.bf16.mxu0 0
  %587 = vmatpush1.bf16.msra.mxu0 %v450
  %588 = vmatprep.subr.bf16.mxu0 0
  %589 = vmatpush1.bf16.msra.mxu0 %v451
  %590 = vmatprep.subr.bf16.mxu0 0
  %591 = vmatpush1.bf16.msra.mxu0 %v452
  %592 = vmatprep.subr.bf16.mxu0 0
  %593 = vmatpush1.bf16.msra.mxu0 %v453
  %594 = vmatprep.subr.bf16.mxu0 0
  %595 = vmatpush1.bf16.msra.mxu0 %v454
  %596 = vmatprep.subr.bf16.mxu0 0
  %597 = vmatpush1.bf16.msra.mxu0 %v455
  %598 = vmatprep.subr.bf16.mxu0 0
  %599 = vmatpush1.bf16.msra.mxu0 %v456
  %600 = vmatprep.subr.bf16.mxu0 0
  %601 = vmatpush1.bf16.msra.mxu0 %v457
  %602 = vmatprep.mubr.bf16.mxu0 %v171
  %603 = vmatmul.mubr.bf16.gmra.mrb[0].mxu0 %v170
  %v604 = vpop.f32.mrb[0].mxu0
  %v605 = vadd.f32 %v156, %v604
  %v606 = vpop.f32.mrb[0].mxu0
  %v607 = vpop.f32.mrb[0].mxu0
  %v608 = vpop.f32.mrb[0].mxu0
  %609 = vdwg.mxu0
  %610 = vmatprep.subr.bf16.mxu0 0
  %611 = vmatpush1.bf16.msra.mxu0 %v458
  %612 = vmatprep.subr.bf16.mxu0 0
  %613 = vmatpush1.bf16.msra.mxu0 %v459
  %614 = vmatprep.subr.bf16.mxu0 0
  %615 = vmatpush1.bf16.msra.mxu0 %v460
  %616 = vmatprep.subr.bf16.mxu0 0
  %617 = vmatpush1.bf16.msra.mxu0 %v461
  %618 = vmatprep.subr.bf16.mxu0 0
  %619 = vmatpush1.bf16.msra.mxu0 %v462
  %620 = vmatprep.subr.bf16.mxu0 0
  %621 = vmatpush1.bf16.msra.mxu0 %v463
  %622 = vmatprep.subr.bf16.mxu0 0
  %623 = vmatpush1.bf16.msra.mxu0 %v464
  %624 = vmatprep.subr.bf16.mxu0 0
  %625 = vmatpush1.bf16.msra.mxu0 %v465
  %626 = vmatprep.subr.bf16.mxu0 0
  %627 = vmatpush1.bf16.msra.mxu0 %v466
  %628 = vmatprep.subr.bf16.mxu0 0
  %629 = vmatpush1.bf16.msra.mxu0 %v467
  %630 = vmatprep.subr.bf16.mxu0 0
  %631 = vmatpush1.bf16.msra.mxu0 %v468
  %632 = vmatprep.subr.bf16.mxu0 0
  %633 = vmatpush1.bf16.msra.mxu0 %v469
  %634 = vmatprep.subr.bf16.mxu0 0
  %635 = vmatpush1.bf16.msra.mxu0 %v470
  %636 = vmatprep.subr.bf16.mxu0 0
  %637 = vmatpush1.bf16.msra.mxu0 %v471
  %638 = vmatprep.subr.bf16.mxu0 0
  %639 = vmatpush1.bf16.msra.mxu0 %v472
  %640 = vmatprep.subr.bf16.mxu0 0
  %641 = vmatpush1.bf16.msra.mxu0 %v473
  %642 = vmatprep.mubr.bf16.mxu0 %v173
  %643 = vmatmul.mubr.bf16.gmra.mrb[0].mxu0 %v172
  %v644 = vpop.f32.mrb[0].mxu0
  %v645 = vadd.f32 %v605, %v644
  %v646 = vpop.f32.mrb[0].mxu0
  %v647 = vpop.f32.mrb[0].mxu0
  %v648 = vpop.f32.mrb[0].mxu0
  %649 = vdwg.mxu0
  %650 = vmatprep.subr.bf16.mxu0 0
  %651 = vmatpush1.bf16.msra.mxu0 %v474
  %652 = vmatprep.subr.bf16.mxu0 0
  %653 = vmatpush1.bf16.msra.mxu0 %v475
  %654 = vmatprep.subr.bf16.mxu0 0
  %655 = vmatpush1.bf16.msra.mxu0 %v476
  %656 = vmatprep.subr.bf16.mxu0 0
  %657 = vmatpush1.bf16.msra.mxu0 %v477
  %658 = vmatprep.subr.bf16.mxu0 0
  %659 = vmatpush1.bf16.msra.mxu0 %v478
  %660 = vmatprep.subr.bf16.mxu0 0
  %661 = vmatpush1.bf16.msra.mxu0 %v479
  %662 = vmatprep.subr.bf16.mxu0 0
  %663 = vmatpush1.bf16.msra.mxu0 %v480
  %664 = vmatprep.subr.bf16.mxu0 0
  %665 = vmatpush1.bf16.msra.mxu0 %v481
  %666 = vmatprep.subr.bf16.mxu0 0
  %667 = vmatpush1.bf16.msra.mxu0 %v482
  %668 = vmatprep.subr.bf16.mxu0 0
  %669 = vmatpush1.bf16.msra.mxu0 %v483
  %670 = vmatprep.subr.bf16.mxu0 0
  %671 = vmatpush1.bf16.msra.mxu0 %v484
  %672 = vmatprep.subr.bf16.mxu0 0
  %673 = vmatpush1.bf16.msra.mxu0 %v485
  %674 = vmatprep.subr.bf16.mxu0 0
  %675 = vmatpush1.bf16.msra.mxu0 %v486
  %676 = vmatprep.subr.bf16.mxu0 0
  %677 = vmatpush1.bf16.msra.mxu0 %v487
  %678 = vmatprep.subr.bf16.mxu0 0
  %679 = vmatpush1.bf16.msra.mxu0 %v488
  %680 = vmatprep.subr.bf16.mxu0 0
  %681 = vmatpush1.bf16.msra.mxu0 %v489
  %682 = vmatprep.mubr.bf16.mxu0 %v175
  %683 = vmatmul.mubr.bf16.gmra.mrb[0].mxu0 %v174
  %v684 = vpop.f32.mrb[0].mxu0
  %v685 = vadd.f32 %v645, %v684
  %v686 = vpop.f32.mrb[0].mxu0
  %v687 = vpop.f32.mrb[0].mxu0
  %v688 = vpop.f32.mrb[0].mxu0
  %689 = vdwg.mxu0
  %690 = vmatprep.subr.bf16.mxu0 0
  %691 = vmatpush1.bf16.msra.mxu0 %v490
  %692 = vmatprep.subr.bf16.mxu0 0
  %693 = vmatpush1.bf16.msra.mxu0 %v491
  %694 = vmatprep.subr.bf16.mxu0 0
  %695 = vmatpush1.bf16.msra.mxu0 %v492
  %696 = vmatprep.subr.bf16.mxu0 0
  %697 = vmatpush1.bf16.msra.mxu0 %v493
  %698 = vmatprep.subr.bf16.mxu0 0
  %699 = vmatpush1.bf16.msra.mxu0 %v494
  %700 = vmatprep.subr.bf16.mxu0 0
  %701 = vmatpush1.bf16.msra.mxu0 %v495
  %702 = vmatprep.subr.bf16.mxu0 0
  %703 = vmatpush1.bf16.msra.mxu0 %v496
  %704 = vmatprep.subr.bf16.mxu0 0
  %705 = vmatpush1.bf16.msra.mxu0 %v497
  %706 = vmatprep.subr.bf16.mxu0 0
  %707 = vmatpush1.bf16.msra.mxu0 %v498
  %708 = vmatprep.subr.bf16.mxu0 0
  %709 = vmatpush1.bf16.msra.mxu0 %v499
  %710 = vmatprep.subr.bf16.mxu0 0
  %711 = vmatpush1.bf16.msra.mxu0 %v500
  %712 = vmatprep.subr.bf16.mxu0 0
  %713 = vmatpush1.bf16.msra.mxu0 %v501
  %714 = vmatprep.subr.bf16.mxu0 0
  %715 = vmatpush1.bf16.msra.mxu0 %v502
  %716 = vmatprep.subr.bf16.mxu0 0
  %717 = vmatpush1.bf16.msra.mxu0 %v503
  %718 = vmatprep.subr.bf16.mxu0 0
  %719 = vmatpush1.bf16.msra.mxu0 %v504
  %720 = vmatprep.subr.bf16.mxu0 0
  %721 = vmatpush1.bf16.msra.mxu0 %v505
  %722 = vmatprep.mubr.bf16.mxu0 %v177
  %723 = vmatmul.mubr.bf16.gmra.mrb[0].mxu0 %v176
  %v724 = vpop.f32.mrb[0].mxu0
  %v725 = vadd.f32 %v685, %v724
  %v726 = vpop.f32.mrb[0].mxu0
  %v727 = vpop.f32.mrb[0].mxu0
  %v728 = vpop.f32.mrb[0].mxu0
  %729 = vdwg.mxu0
  %s730 = sld [smem:[#allocation2]]
  %v731 = vstv %s730
  %v732 = vrcp.pop %v731
  %v733 = vmul.f32 %v725, %v732
  %734 = vst [vmem:[%s4] sm:$0xff] %v733
  // Predicated region
  $region18: #{temperature_scaling_forward.1} parent=0 // pred_check
    _
  $region19: #{temperature_scaling_forward.1} parent=0 // pred_check_branch
    %736 = sbr.rel (0) target = $region21
  $region20: #{temperature_scaling_forward.1} parent=0 // pred_region
    _
  $region21: #{temperature_scaling_forward.1} parent=0 // pred_fallthru
    _
  // Predicated region
  $region22: #{temperature_scaling_forward.1} parent=0 // pred_check
    _
  $region23: #{temperature_scaling_forward.1} parent=0 // pred_check_branch
    %738 = sbr.rel (0) target = $region25
  $region24: #{temperature_scaling_forward.1} parent=0 // pred_region
    _
  $region25: #{temperature_scaling_forward.1} parent=0 // pred_fallthru
    _

</llo_original>
